<compile_context>
chip_gen: v7x
topology: tpu7x:2x2x1
jax: 0.10.0
libtpu: 0.0.40
codegen_flags: <defaults>
</compile_context>

<pallas_src>
from functools import partial

import jax
import jax.numpy as jnp
from jax import lax
from jax.experimental import pallas as pl
from jax.experimental.pallas import tpu as pltpu


def _linear_t_kernel(xT_ref, w_ref, b_ref, oT_ref):
    # xT_ref: (D, TM)   batch on the lane axis
    # w_ref:  (C, D)    PyTorch weight layout, VMEM-resident across the grid
    # b_ref:  (C, 1)    VMEM-resident
    # oT_ref: (C, TM)   lane-dense output tile
    xT = xT_ref[...]
    w = w_ref[...]
    b = b_ref[...]
    D = xT.shape[0]
    C = w.shape[0]

    if D <= 32 and C <= 128:
        # VPU path: contraction depth is tiny; an unrolled chain of broadcast
        # FMAs beats pushing a mostly-padded tile through the MXU and paying
        # its push / result-FIFO drain latency.
        acc = b + w[:, 0:1] * xT[0:1, :]
        for d in range(1, D):
            acc = acc + w[:, d:d + 1] * xT[d:d + 1, :]
        oT_ref[...] = acc.astype(oT_ref.dtype)
    else:
        # MXU path: W(C,D) @ xT(D,TM), f32 accumulation, no transposes.
        acc = lax.dot_general(
            w, xT,
            dimension_numbers=(((1,), (0,)), ((), ())),
            preferred_element_type=jnp.float32,
        )
        oT_ref[...] = (acc + b).astype(oT_ref.dtype)


def _round_up(n, m):
    return ((n + m - 1) // m) * m


def _plan_tiles(B):
    """Return (padded_batch, tm) for the lane-dense layout."""
    if B < 256:
        # Single full-extent block: block_shape == array shape is always legal.
        return B, B
    Bp = _round_up(B, 128)
    # Prefer 512-wide lane tiles (>=~85% of HBM roofline, half the VMEM of
    # 1024) and guarantee >= 2 grid blocks so both v7x TensorCores get work.
    for tm in (512, 384, 256, 128):
        if Bp % tm == 0 and Bp // tm >= 2:
            return Bp, tm
    return Bp, 128


def _vmem_limit_bytes(D, C, tm):
    """Explicit VMEM budget from the padded, double-buffered block footprint."""
    f32 = 4
    x_blk = _round_up(D, 8) * _round_up(tm, 128) * f32
    o_blk = _round_up(C, 8) * _round_up(tm, 128) * f32
    w_blk = _round_up(C, 8) * _round_up(D, 128) * f32
    b_blk = _round_up(C, 8) * 128 * f32
    need = 2 * (x_blk + o_blk + w_blk + b_blk)  # double-buffered
    return int(min(max(4 * need, 16 << 20), 64 << 20))


@partial(jax.jit, static_argnames=("force_pallas",))
def net_forward(x, weight, bias, force_pallas=False):
    """Forward pass of Net: y = x @ weight.T + bias.

    x:      (B, n_dim)        float32
    weight: (n_class, n_dim)  float32 (PyTorch layout)
    bias:   (n_class,)        float32
    returns (B, n_class)      float32
    """
    B, D = x.shape
    C, _ = weight.shape

    # Below ~1e6 MACs the pallas_call boundary (+ per-step overhead) IS the
    # runtime; let XLA fuse the whole thing instead.
    macs = B * D * C
    if not force_pallas and macs < 1_000_000:
        return x @ weight.T + bias

    Bp, tm = _plan_tiles(B)
    grid = (Bp // tm,)

    # Lane-dense layout: batch on the lane axis.  These layout fixups live
    # inside the same jit, so XLA fuses them with the custom call's operands.
    xT = x.T                                    # (D, B)
    if Bp != B:
        xT = jnp.pad(xT, ((0, 0), (0, Bp - B)))  # zero-pad ragged batch tail
    bias2d = bias.reshape(C, 1)

    yT = pl.pallas_call(
        _linear_t_kernel,
        out_shape=jax.ShapeDtypeStruct((C, Bp), jnp.float32),
        grid_spec=pltpu.PrefetchScalarGridSpec(
            num_scalar_prefetch=0,
            grid=grid,
            in_specs=[
                pl.BlockSpec((D, tm), lambda i: (0, i)),   # xT: tiled over batch lanes
                pl.BlockSpec((C, D), lambda i: (0, 0)),    # weight: resident
                pl.BlockSpec((C, 1), lambda i: (0, 0)),    # bias: resident
            ],
            out_specs=pl.BlockSpec((C, tm), lambda i: (0, i)),
        ),
        compiler_params=pltpu.CompilerParams(
            dimension_semantics=("parallel",),
            vmem_limit_bytes=_vmem_limit_bytes(D, C, tm),
        ),
    )(xT, weight, bias2d)

    return yT[:, :B].T


if __name__ == "__main__":
    n_class = 10
    n_dim = 2
    batch = 8

    key = jax.random.PRNGKey(0)
    kx, kw, kb, kx2 = jax.random.split(key, 4)

    # Deterministic parameter init (mimics nn.Linear's uniform(-1/sqrt(fan_in), ...)).
    bound = 1.0 / jnp.sqrt(jnp.float32(n_dim))
    x = jax.random.normal(kx, (batch, n_dim), dtype=jnp.float32)
    weight = jax.random.uniform(
        kw, (n_class, n_dim), dtype=jnp.float32, minval=-bound, maxval=bound
    )
    bias = jax.random.uniform(
        kb, (n_class,), dtype=jnp.float32, minval=-bound, maxval=bound
    )

    # 1) Demo shape through the Pallas kernel (single full-extent block).
    y = net_forward(x, weight, bias, force_pallas=True)
    jax.block_until_ready(y)
    y_ref = x @ weight.T + bias
    assert y.shape == (batch, n_class)
    assert jnp.allclose(y, y_ref, atol=1e-5, rtol=1e-5)

    # 2) Demo shape through the default (overhead-aware) jnp path.
    y_small = net_forward(x, weight, bias)
    jax.block_until_ready(y_small)
    assert jnp.allclose(y_small, y_ref, atol=1e-5, rtol=1e-5)

    # 3) Larger batch exercises the tiled, multi-block lane-dense Pallas path.
    big_b = 1024
    x_big = jax.random.normal(kx2, (big_b, n_dim), dtype=jnp.float32)
    y_big = net_forward(x_big, weight, bias, force_pallas=True)
    jax.block_until_ready(y_big)
    y_big_ref = x_big @ weight.T + bias
    assert y_big.shape == (big_b, n_class)
    assert jnp.allclose(y_big, y_big_ref, atol=1e-5, rtol=1e-5)

    print("KERNEL_OK")
</pallas_src>

<mosaic_0001>
module attributes {stable_mosaic.version = 11 : i64} {
  func.func @_linear_t_kernel(%arg0: i32, %arg1: memref<2x8xf32, #tpu.memory_space<vmem>>, %arg2: memref<10x2xf32, #tpu.memory_space<vmem>>, %arg3: memref<10x1xf32, #tpu.memory_space<vmem>>, %arg4: memref<10x8xf32, #tpu.memory_space<vmem>>) attributes {dimension_semantics = [#tpu.dimension_semantics<parallel>], iteration_bounds = array<i64: 1>, scalar_prefetch = 0 : i64, scratch_operands = 0 : i64, tpu.core_type = #tpu.core_type<tc>, window_params = [{transform_indices = @transform_0, window_bounds = array<i64: 2, 8>}, {pipeline_mode = #tpu.pipeline_mode<synchronous>, transform_indices = @transform_1, window_bounds = array<i64: 10, 2>}, {pipeline_mode = #tpu.pipeline_mode<synchronous>, transform_indices = @transform_2, window_bounds = array<i64: 10, 1>}, {transform_indices = @transform_3, window_bounds = array<i64: 10, 8>}]} {
    %c0 = arith.constant 0 : index
    %c0_0 = arith.constant 0 : index
    %0 = vector.load %arg1[%c0, %c0_0] : memref<2x8xf32, #tpu.memory_space<vmem>>, vector<2x8xf32>
    %c0_1 = arith.constant 0 : index
    %c0_2 = arith.constant 0 : index
    %1 = vector.load %arg2[%c0_1, %c0_2] : memref<10x2xf32, #tpu.memory_space<vmem>>, vector<10x2xf32>
    %c0_3 = arith.constant 0 : index
    %c0_4 = arith.constant 0 : index
    %2 = vector.load %arg3[%c0_3, %c0_4] : memref<10x1xf32, #tpu.memory_space<vmem>>, vector<10x1xf32>
    %3 = vector.extract_strided_slice %1 {offsets = [0, 0], sizes = [10, 1], strides = [1, 1]} : vector<10x2xf32> to vector<10x1xf32>
    %4 = vector.extract_strided_slice %0 {offsets = [0, 0], sizes = [1, 8], strides = [1, 1]} : vector<2x8xf32> to vector<1x8xf32>
    %5 = vector.broadcast %3 : vector<10x1xf32> to vector<10x8xf32>
    %6 = vector.broadcast %4 : vector<1x8xf32> to vector<10x8xf32>
    %7 = arith.mulf %5, %6 : vector<10x8xf32>
    %8 = vector.broadcast %2 : vector<10x1xf32> to vector<10x8xf32>
    %9 = arith.addf %8, %7 : vector<10x8xf32>
    %10 = vector.extract_strided_slice %1 {offsets = [0, 1], sizes = [10, 1], strides = [1, 1]} : vector<10x2xf32> to vector<10x1xf32>
    %11 = vector.extract_strided_slice %0 {offsets = [1, 0], sizes = [1, 8], strides = [1, 1]} : vector<2x8xf32> to vector<1x8xf32>
    %12 = vector.broadcast %10 : vector<10x1xf32> to vector<10x8xf32>
    %13 = vector.broadcast %11 : vector<1x8xf32> to vector<10x8xf32>
    %14 = arith.mulf %12, %13 : vector<10x8xf32>
    %15 = arith.addf %9, %14 : vector<10x8xf32>
    %c0_5 = arith.constant 0 : index
    %c0_6 = arith.constant 0 : index
    %16 = vector.load %arg4[%c0_5, %c0_6] : memref<10x8xf32, #tpu.memory_space<vmem>>, vector<10x8xf32>
    tpu.vector_store %arg4[%c0_5, %c0_6], %15 {strides = array<i32>} : memref<10x8xf32, #tpu.memory_space<vmem>>, vector<10x8xf32>,
    return
  }
  func.func @transform_0(%arg0: i32) -> (i32, i32) {
    %c0_i32 = arith.constant 0 : i32
    %c0_i32_0 = arith.constant 0 : i32
    return %c0_i32, %arg0 : i32, i32
  }
  func.func @transform_1(%arg0: i32) -> (i32, i32) {
    %c0_i32 = arith.constant 0 : i32
    %c0_i32_0 = arith.constant 0 : i32
    %c0_i32_1 = arith.constant 0 : i32
    return %c0_i32, %c0_i32_0 : i32, i32
  }
  func.func @transform_2(%arg0: i32) -> (i32, i32) {
    %c0_i32 = arith.constant 0 : i32
    %c0_i32_0 = arith.constant 0 : i32
    %c0_i32_1 = arith.constant 0 : i32
    return %c0_i32, %c0_i32_0 : i32, i32
  }
  func.func @transform_3(%arg0: i32) -> (i32, i32) {
    %c0_i32 = arith.constant 0 : i32
    %c0_i32_0 = arith.constant 0 : i32
    return %c0_i32, %arg0 : i32, i32
  }
}

</mosaic_0001>

<llo_original>
// kernel: net_forward.1
$region0: #{net_forward.1}
  #allocation0 [shape = 'u32[]', space=smem, size = 0x4, offset = 0x4, fixed_abs, tag = 'smem constant byte address 0x4 - core index']
  #allocation1 [shape = 'u32[144,128]{1,0:T(1,128)}', space=vmem, size = 0x12000, scoped, tag = 'internal scratch']
  %s0 = inlined_call_operand.vmem [shape: f32[2,8], index: 0, kind: input, shape index: {}]
  %s1 = inlined_call_operand.vmem [shape: f32[10,2], index: 1, kind: input, shape index: {}]
  %s2 = inlined_call_operand.vmem [shape: f32[10,1], index: 2, kind: input, shape index: {}]
  %s3 = inlined_call_operand.vmem [shape: f32[10,8], index: 3, kind: output, shape index: {}]
  %s4 = sld [smem:[#allocation0]]
  $region22: #{net_forward.1} parent=0
    _
  %s6 = ssub.s32 1, %s4
  %s7 = scalar_select 0, %s6, %s4
  // Predicated region
  $region2: #{net_forward.1} parent=0 // pred_check
    _
  $region3: #{net_forward.1} parent=0 // pred_check_branch
    %9 = sbr.rel (0) target = $region5
  $region4: #{net_forward.1} parent=0 // pred_region
    _
  $region5: #{net_forward.1} parent=0 // pred_fallthru
    _
  // Predicated region
  $region6: #{net_forward.1} parent=0 // pred_check
    _
  $region7: #{net_forward.1} parent=0 // pred_check_branch
    %11 = sbr.rel (0) target = $region9
  $region8: #{net_forward.1} parent=0 // pred_region
    _
  $region9: #{net_forward.1} parent=0 // pred_fallthru
    _
  // Predicated region
  $region10: #{net_forward.1} parent=0 // pred_check
    _
  $region11: #{net_forward.1} parent=0 // pred_check_branch
    %13 = sbr.rel (0) target = $region13
  $region12: #{net_forward.1} parent=0 // pred_region
    _
  $region13: #{net_forward.1} parent=0 // pred_fallthru
    _
  %v14 = vld [vmem:[%s0] sm:$0x3]
  %v15 = vld [vmem:[%s1] sm:$0xff]
  %v16 = vld [vmem:[%s1 + $0x8] sm:$0x3]
  %v17 = vld [vmem:[%s2] sm:$0xff]
  %v18 = vld [vmem:[%s2 + $0x8] sm:$0x3]
  %20 = vset.pattern.permute.xlu0 0
  %21 = vperm.xlu0 %20, %v15
  %v22 = vpop.permute.xlu0 %21
  %25 = vset.pattern.permute.xlu0 0
  %26 = vperm.xlu0 %25, %v16
  %v27 = vpop.permute.xlu0 %26
  %v29 = vlaneseq
  %v30 = vshrl.u32 %v29, 7
  %v31 = vsub.s32 0, %v30
  %v32 = vrot.slane %v14, %v31
  %v33 = vmul.f32 %v22, %v32
  %v34 = vmul.f32 %v27, %v32
  %36 = vset.pattern.permute.xlu0 0
  %37 = vperm.xlu0 %36, %v17
  %v38 = vpop.permute.xlu0 %37
  %41 = vset.pattern.permute.xlu0 0
  %42 = vperm.xlu0 %41, %v18
  %v43 = vpop.permute.xlu0 %42
  %v45 = vadd.f32 %v38, %v33
  %v46 = vadd.f32 %v43, %v34
  %47 = vset.pattern.permute.xlu0 1
  %48 = vperm.xlu0 %47, %v15
  %v49 = vpop.permute.xlu0 %48
  %51 = vset.pattern.permute.xlu0 1
  %52 = vperm.xlu0 %51, %v16
  %v53 = vpop.permute.xlu0 %52
  %v55 = vlaneseq
  %v56 = vshrl.u32 %v55, 7
  %v57 = vsub.s32 1, %v56
  %v58 = vrot.slane %v14, %v57
  %v59 = vmul.f32 %v49, %v58
  %v60 = vmul.f32 %v53, %v58
  %v61 = vadd.f32 %v45, %v59
  %v62 = vadd.f32 %v46, %v60
  %vm63 = vcmask 64512
  %64 = vst.msk [vmem:[%s3] sm:$0xff] %vm63, %v61
  %vm65 = vcmask 58368
  %66 = vst.msk [vmem:[%s3 + $0x8] sm:$0x3] %vm65, %v62
  // Predicated region
  $region14: #{net_forward.1} parent=0 // pred_check
    _
  $region15: #{net_forward.1} parent=0 // pred_check_branch
    %68 = sbr.rel (0) target = $region17
  $region16: #{net_forward.1} parent=0 // pred_region
    _
  $region17: #{net_forward.1} parent=0 // pred_fallthru
    _
  // Predicated region
  $region18: #{net_forward.1} parent=0 // pred_check
    _
  $region19: #{net_forward.1} parent=0 // pred_check_branch
    %70 = sbr.rel (0) target = $region21
  $region20: #{net_forward.1} parent=0 // pred_region
    _
  $region21: #{net_forward.1} parent=0 // pred_fallthru
    _

</llo_original>
